<compile_context>
chip_gen: v6e
topology: v6e:2x2x1
jax: 0.10.0
libtpu: 0.0.40
codegen_flags: <defaults>
</compile_context>

<pallas_src>
import functools

import jax
import jax.numpy as jnp
from jax import lax
from jax.experimental import pallas as pl
from jax.experimental.pallas import tpu as pltpu


def _round_up(x, m):
    return (x + m - 1) // m * m


def _patch_embed_kernel(p_ref, w_ref, b_ref, o_ref):
    # p_ref: (TM, K_pad)    bf16 flattened-patch tile for this grid step
    # w_ref: (K_pad, E_pad) bf16 projection weight (same block every step -> resident)
    # b_ref: (1, E_pad)     f32 bias (resident)
    # o_ref: (TM, E_pad)    output tile (f32 or bf16)
    acc = jnp.dot(p_ref[...], w_ref[...], preferred_element_type=jnp.float32)
    o_ref[...] = (acc + b_ref[...]).astype(o_ref.dtype)


@functools.partial(jax.jit, static_argnames=("patch_size", "out_dtype"))
def patch_embed_pallas(x, weight, bias, patch_size, out_dtype=jnp.float32):
    """AST/ViT PatchEmbed forward.

    x: (B, C, H, W) f32.  weight: (E, C, ph, pw).  bias: (E,).
    Returns (B, num_patches, E) with num_patches = (H//ph) * (W//pw).
    """
    B, C, H, W = x.shape
    E = weight.shape[0]
    ph, pw = patch_size
    nH, nW = H // ph, W // pw
    num_patches = nH * nW
    K = C * ph * pw
    M = B * num_patches

    # Lane-dense padded contraction/output dims (zero padding is exact for the dot).
    K_pad = _round_up(K, 128)
    E_pad = _round_up(E, 128)

    # M tile: as large as possible (<= 512) while guaranteeing >= 2 grid steps
    # whenever M > 128, so the "parallel" M axis really splits across both v7x
    # TensorCores and per-step pipeline overhead stays amortized on v5e/v6e.
    # TM is always a multiple of 128 (sublane / MXU aligned).
    if M <= 128:
        TM = 128
    else:
        TM = min(512, _round_up((M + 1) // 2, 128))
    M_pad = _round_up(M, TM)
    grid_m = M_pad // TM

    # --- glue: bf16 cast FIRST, then patchify (stride == kernel => plain
    # reshape/transpose) flattened in (c, u, v) order to match the PyTorch
    # conv-weight contraction order.  allow_input_fusion below lets XLA fuse
    # this producer into the Pallas input feed, so the (M_pad, K_pad) patch
    # matrix is never materialized in HBM.
    xb = x.astype(jnp.bfloat16)
    xp = xb.reshape(B, C, nH, ph, nW, pw)
    xp = jnp.transpose(xp, (0, 2, 4, 1, 3, 5))            # (B, nH, nW, C, ph, pw)
    patches = xp.reshape(M, K)
    patches = jnp.pad(patches, ((0, M_pad - M), (0, K_pad - K)))

    w2d = weight.astype(jnp.bfloat16).reshape(E, K).T      # (K, E) bf16
    w2d = jnp.pad(w2d, ((0, K_pad - K), (0, E_pad - E)))
    b2d = jnp.pad(bias.astype(jnp.float32).reshape(1, E), ((0, 0), (0, E_pad - E)))

    # Explicit scoped-VMEM budget (v5e default is only 16 MiB): streamed patch
    # tiles + resident weight + bias + output tiles, with ~1.5x headroom.
    out_bytes = jnp.dtype(out_dtype).itemsize
    vmem_need = (2 * TM * K_pad * 2            # patch tiles, double-buffered bf16
                 + 2 * K_pad * E_pad * 2       # weight (conservatively 2 buffers)
                 + 2 * E_pad * 4               # bias
                 + 2 * TM * E_pad * out_bytes)  # output tiles, double-buffered
    vmem_limit = min(64 * 1024 * 1024, max(32 * 1024 * 1024, (vmem_need * 3) // 2))

    out = pl.pallas_call(
        _patch_embed_kernel,
        out_shape=jax.ShapeDtypeStruct((M_pad, E_pad), out_dtype),
        grid_spec=pl.GridSpec(
            grid=(grid_m,),
            in_specs=[
                pl.BlockSpec((TM, K_pad), lambda i: (i, 0)),      # streamed over M
                pl.BlockSpec((K_pad, E_pad), lambda i: (0, 0)),   # resident weight
                pl.BlockSpec((1, E_pad), lambda i: (0, 0)),       # resident bias
            ],
            out_specs=pl.BlockSpec((TM, E_pad), lambda i: (i, 0)),
        ),
        compiler_params=pltpu.CompilerParams(
            dimension_semantics=("parallel",),        # shard M across v7x's 2 TCs
            allow_input_fusion=[True, False, False],  # fuse patchify into input DMA
            vmem_limit_bytes=int(vmem_limit),
        ),
    )(patches, w2d, b2d)

    return out[:M, :E].reshape(B, num_patches, E)


def _reference(x, weight, bias, patch_size):
    # Pure-JAX f32 reference: strided conv (NCHW, OIHW) + flatten(2).transpose(1, 2)
    y = lax.conv_general_dilated(
        x, weight, window_strides=patch_size, padding="VALID",
        dimension_numbers=("NCHW", "OIHW", "NCHW"))
    y = y + bias.reshape(1, -1, 1, 1)
    B, E, nH, nW = y.shape
    return jnp.transpose(y.reshape(B, E, nH * nW), (0, 2, 1))


if __name__ == "__main__":
    # Small shapes consistent with PatchEmbed: img 16x16, patch 8x8, 4 chans, dim 32.
    B, C, H, W = 2, 4, 16, 16
    ph, pw = 8, 8
    E = 32

    key = jax.random.PRNGKey(0)
    kx, kw, kb = jax.random.split(key, 3)
    x = jax.random.normal(kx, (B, C, H, W), dtype=jnp.float32)
    weight = jax.random.normal(kw, (E, C, ph, pw), dtype=jnp.float32) * 0.02
    bias = jax.random.normal(kb, (E,), dtype=jnp.float32) * 0.02

    out = patch_embed_pallas(x, weight, bias, (ph, pw))
    out = jax.block_until_ready(out)

    ref = _reference(x, weight, bias, (ph, pw))
    assert out.shape == (B, (H // ph) * (W // pw), E)
    # bf16 matmul operands (f32 accumulate) vs f32 conv reference -> loosened tol.
    assert jnp.allclose(out, ref, atol=2e-2, rtol=2e-2), float(jnp.max(jnp.abs(out - ref)))

    print("KERNEL_OK")
</pallas_src>

<mosaic_0001>
module attributes {stable_mosaic.version = 11 : i64} {
  func.func @_patch_embed_kernel(%arg0: i32, %arg1: memref<128x256xbf16, #tpu.memory_space<vmem>>, %arg2: memref<256x128xbf16, #tpu.memory_space<vmem>>, %arg3: memref<1x128xf32, #tpu.memory_space<vmem>>, %arg4: memref<128x128xf32, #tpu.memory_space<vmem>>) attributes {dimension_semantics = [#tpu.dimension_semantics<parallel>], iteration_bounds = array<i64: 1>, scalar_prefetch = 0 : i64, scratch_operands = 0 : i64, tpu.core_type = #tpu.core_type<tc>, window_params = [{transform_indices = @transform_0, window_bounds = array<i64: 128, 256>}, {pipeline_mode = #tpu.pipeline_mode<synchronous>, transform_indices = @transform_1, window_bounds = array<i64: 256, 128>}, {pipeline_mode = #tpu.pipeline_mode<synchronous>, transform_indices = @transform_2, window_bounds = array<i64: 1, 128>}, {transform_indices = @transform_3, window_bounds = array<i64: 128, 128>}]} {
    %c0 = arith.constant 0 : index
    %c0_0 = arith.constant 0 : index
    %0 = vector.load %arg1[%c0, %c0_0] : memref<128x256xbf16, #tpu.memory_space<vmem>>, vector<128x256xbf16>
    %c0_1 = arith.constant 0 : index
    %c0_2 = arith.constant 0 : index
    %1 = vector.load %arg2[%c0_1, %c0_2] : memref<256x128xbf16, #tpu.memory_space<vmem>>, vector<256x128xbf16>
    %cst = arith.constant dense<0.000000e+00> : vector<128x128xf32>
    %2 = tpu.matmul %0, %1, %cst {dimension_numbers = #tpu.dot_dimension_numbers<[1], [0], [0], [1], [0, 0, 1, 1], [], []>} : vector<128x256xbf16>, vector<256x128xbf16>, vector<128x128xf32> -> vector<128x128xf32>
    %c0_3 = arith.constant 0 : index
    %c0_4 = arith.constant 0 : index
    %3 = vector.load %arg3[%c0_3, %c0_4] : memref<1x128xf32, #tpu.memory_space<vmem>>, vector<1x128xf32>
    %4 = vector.broadcast %3 : vector<1x128xf32> to vector<128x128xf32>
    %5 = arith.addf %2, %4 : vector<128x128xf32>
    %c0_5 = arith.constant 0 : index
    %c0_6 = arith.constant 0 : index
    %6 = vector.load %arg4[%c0_5, %c0_6] : memref<128x128xf32, #tpu.memory_space<vmem>>, vector<128x128xf32>
    tpu.vector_store %arg4[%c0_5, %c0_6], %5 {strides = array<i32>} : memref<128x128xf32, #tpu.memory_space<vmem>>, vector<128x128xf32>,
    return
  }
  func.func @transform_0(%arg0: i32) -> (i32, i32) {
    %c0_i32 = arith.constant 0 : i32
    %c0_i32_0 = arith.constant 0 : i32
    return %arg0, %c0_i32 : i32, i32
  }
  func.func @transform_1(%arg0: i32) -> (i32, i32) {
    %c0_i32 = arith.constant 0 : i32
    %c0_i32_0 = arith.constant 0 : i32
    %c0_i32_1 = arith.constant 0 : i32
    return %c0_i32, %c0_i32_0 : i32, i32
  }
  func.func @transform_2(%arg0: i32) -> (i32, i32) {
    %c0_i32 = arith.constant 0 : i32
    %c0_i32_0 = arith.constant 0 : i32
    %c0_i32_1 = arith.constant 0 : i32
    return %c0_i32, %c0_i32_0 : i32, i32
  }
  func.func @transform_3(%arg0: i32) -> (i32, i32) {
    %c0_i32 = arith.constant 0 : i32
    %c0_i32_0 = arith.constant 0 : i32
    return %arg0, %c0_i32 : i32, i32
  }
}

</mosaic_0001>

<llo_original>
// kernel: patch_embed_pallas.2
$region0: #{patch_embed_pallas.2}
  #allocation0 [shape = 'u32[]', space=smem, size = 0x4, offset = 0x4, fixed_abs, tag = 'smem constant byte address 0x4 - core index']
  #allocation1 [shape = 'u32[144,128]{1,0:T(1,128)}', space=vmem, size = 0x12000, scoped, tag = 'internal scratch']
  #allocation2 [shape = 'u32[2048]{0}', space=vmem, size = 0x2000, scoped, tag = 'scoped memory for patch_embed_pallas.2']
  #allocation3 [shape = 'u32[2048]{0}', space=vmem, size = 0x2000, scoped, tag = 'scoped memory for patch_embed_pallas.2']
  #allocation4 [shape = 'u32[2048]{0}', space=vmem, size = 0x2000, scoped, tag = 'scoped memory for patch_embed_pallas.2']
  #allocation5 [shape = 'u32[2048]{0}', space=vmem, size = 0x2000, scoped, tag = 'scoped memory for patch_embed_pallas.2']
  #allocation6 [shape = 'u32[2048]{0}', space=vmem, size = 0x2000, scoped, tag = 'scoped memory for patch_embed_pallas.2']
  %s0 = inlined_call_operand.vmem [shape: bf16[256,128], index: 0, kind: input, shape index: {}]
  %s1 = inlined_call_operand.vmem [shape: f32[1,128], index: 1, kind: input, shape index: {}]
  %s2 = inlined_call_operand.vmem [shape: bf16[8,256], index: 2, kind: input, shape index: {}]
  %s3 = inlined_call_operand.<no memory space> [shape: bf16[], index: 3, kind: input, shape index: {}]
  %s4 = inlined_call_operand.vmem [shape: f32[128,128], index: 4, kind: output, shape index: {}]
  %s5 = sld [smem:[#allocation0]]
  $region22: #{patch_embed_pallas.2} parent=0
    _
  %s7 = ssub.s32 1, %s5
  %s8 = scalar_select 0, %s7, %s5
  %v9 = vstv %s3
  %v10 = vunpack.i.l.bf16 %v9
  %v12 = vunpack.i.h.bf16 %v9
  $region1: #{patch_embed_pallas.2} parent=0
    #allocation7 [shape = 'u8[65536]{0}', space=vmem, size = 0x10000, dematerialized = true, scoped, tag = 'FusionAdapter Buffer %fusion.1 = bf16[128,256]{1,0:T(8,128)(2,1)} fusion(%param_2.1, %param_3), kind=kLoop, calls=%fused_computation.2.clone, metadata={op_name="jit(patch_embed_pallas)/jit(_pad)/pad" stack_frame_id=11}']
    // Predicated region
    $region2: #{patch_embed_pallas.2} parent=1 // pred_check
      _
    $region3: #{patch_embed_pallas.2} parent=1 // pred_check_branch
      %15 = sbr.rel (0) target = $region5
    $region4: #{patch_embed_pallas.2} parent=1 // pred_region
      _
    $region5: #{patch_embed_pallas.2} parent=1 // pred_fallthru
      _
    // Predicated region
    $region6: #{patch_embed_pallas.2} parent=1 // pred_check
      _
    $region7: #{patch_embed_pallas.2} parent=1 // pred_check_branch
      %17 = sbr.rel (0) target = $region9
    $region8: #{patch_embed_pallas.2} parent=1 // pred_region
      _
    $region9: #{patch_embed_pallas.2} parent=1 // pred_fallthru
      _
    // Predicated region
    $region10: #{patch_embed_pallas.2} parent=1 // pred_check
      _
    $region11: #{patch_embed_pallas.2} parent=1 // pred_check_branch
      %19 = sbr.rel (0) target = $region13
    $region12: #{patch_embed_pallas.2} parent=1 // pred_region
      _
    $region13: #{patch_embed_pallas.2} parent=1 // pred_fallthru
      _
    %s21 = sor.u32 255, 127
    %s22 = sand.u32 %s21, 85
    %s23 = sshrl.u32 %s22, 1
    %s24 = sor.u32 %s22, %s23
    %s25 = sand.u32 51, %s24
    %s26 = sshrl.u32 %s25, 2
    %s27 = sor.u32 %s25, %s26
    %s28 = sand.u32 15, %s27
    %v29 = vld [vmem:[%s2] sm:%s28]
    %v30 = vunpack.c.l.bf16 %v29
    %v31 = vunpack.c.h.bf16 %v29
    %v32 = vpack.c.bf16 0.0, %v30
    %s34 = ssub.s32 16, 1
    %35 = vst [vmem:[#allocation7] sm:%s34] %v32
    %s36 = scalar_lea.vmem %s2, 4
    %s38 = sor.u32 255, 127
    %s39 = sand.u32 %s38, 85
    %s40 = sshrl.u32 %s39, 1
    %s41 = sor.u32 %s39, %s40
    %s42 = sand.u32 51, %s41
    %s43 = sshrl.u32 %s42, 2
    %s44 = sor.u32 %s42, %s43
    %s45 = sand.u32 15, %s44
    %v46 = vld [vmem:[%s36] sm:%s45]
    %v47 = vunpack.c.l.bf16 %v46
    %v48 = vunpack.c.h.bf16 %v46
    %s49 = scalar_lea.vmem [#allocation7], 4
    %v50 = vpack.c.bf16 0.0, %v47
    %s52 = ssub.s32 16, 1
    %53 = vst [vmem:[%s49] sm:%s52] %v50
    %s54 = scalar_lea.vmem [#allocation7], 8
    %v55 = vpack.c.bf16 0.0, %v10
    %s57 = ssub.s32 16, 1
    %58 = vst [vmem:[%s54] sm:%s57] %v55
    %s59 = scalar_lea.vmem [#allocation7], 12
    %v60 = vpack.c.bf16 0.0, %v10
    %s62 = ssub.s32 16, 1
    %63 = vst [vmem:[%s59] sm:%s62] %v60
    %s64 = scalar_lea.vmem [#allocation7], 16
    %v65 = vpack.c.bf16 0.0, %v10
    %s67 = ssub.s32 16, 1
    %68 = vst [vmem:[%s64] sm:%s67] %v65
    %s69 = scalar_lea.vmem [#allocation7], 20
    %v70 = vpack.c.bf16 0.0, %v10
    %s72 = ssub.s32 16, 1
    %73 = vst [vmem:[%s69] sm:%s72] %v70
    %s74 = scalar_lea.vmem [#allocation7], 24
    %v75 = vpack.c.bf16 0.0, %v10
    %s77 = ssub.s32 16, 1
    %78 = vst [vmem:[%s74] sm:%s77] %v75
    %s79 = scalar_lea.vmem [#allocation7], 28
    %v80 = vpack.c.bf16 0.0, %v10
    %s82 = ssub.s32 16, 1
    %83 = vst [vmem:[%s79] sm:%s82] %v80
    %s84 = scalar_lea.vmem [#allocation7], 32
    %v85 = vpack.c.bf16 0.0, %v10
    %s87 = ssub.s32 16, 1
    %88 = vst [vmem:[%s84] sm:%s87] %v85
    %s89 = scalar_lea.vmem [#allocation7], 36
    %v90 = vpack.c.bf16 0.0, %v10
    %s92 = ssub.s32 16, 1
    %93 = vst [vmem:[%s89] sm:%s92] %v90
    %s94 = scalar_lea.vmem [#allocation7], 40
    %v95 = vpack.c.bf16 0.0, %v10
    %s97 = ssub.s32 16, 1
    %98 = vst [vmem:[%s94] sm:%s97] %v95
    %s99 = scalar_lea.vmem [#allocation7], 44
    %v100 = vpack.c.bf16 0.0, %v10
    %s102 = ssub.s32 16, 1
    %103 = vst [vmem:[%s99] sm:%s102] %v100
    %s104 = scalar_lea.vmem [#allocation7], 48
    %v105 = vpack.c.bf16 0.0, %v10
    %s107 = ssub.s32 16, 1
    %108 = vst [vmem:[%s104] sm:%s107] %v105
    %s109 = scalar_lea.vmem [#allocation7], 52
    %v110 = vpack.c.bf16 0.0, %v10
    %s112 = ssub.s32 16, 1
    %113 = vst [vmem:[%s109] sm:%s112] %v110
    %s114 = scalar_lea.vmem [#allocation7], 56
    %v115 = vpack.c.bf16 0.0, %v10
    %s117 = ssub.s32 16, 1
    %118 = vst [vmem:[%s114] sm:%s117] %v115
    %s119 = scalar_lea.vmem [#allocation7], 60
    %v120 = vpack.c.bf16 0.0, %v10
    %s122 = ssub.s32 16, 1
    %123 = vst [vmem:[%s119] sm:%s122] %v120
    %s124 = scalar_lea.vmem [#allocation7], 64
    %v125 = vpack.c.bf16 0.0, %v10
    %s127 = ssub.s32 16, 1
    %128 = vst [vmem:[%s124] sm:%s127] %v125
    %s129 = scalar_lea.vmem [#allocation7], 68
    %v130 = vpack.c.bf16 0.0, %v10
    %s132 = ssub.s32 16, 1
    %133 = vst [vmem:[%s129] sm:%s132] %v130
    %s134 = scalar_lea.vmem [#allocation7], 72
    %v135 = vpack.c.bf16 0.0, %v10
    %s137 = ssub.s32 16, 1
    %138 = vst [vmem:[%s134] sm:%s137] %v135
    %s139 = scalar_lea.vmem [#allocation7], 76
    %v140 = vpack.c.bf16 0.0, %v10
    %s142 = ssub.s32 16, 1
    %143 = vst [vmem:[%s139] sm:%s142] %v140
    %s144 = scalar_lea.vmem [#allocation7], 80
    %v145 = vpack.c.bf16 0.0, %v10
    %s147 = ssub.s32 16, 1
    %148 = vst [vmem:[%s144] sm:%s147] %v145
    %s149 = scalar_lea.vmem [#allocation7], 84
    %v150 = vpack.c.bf16 0.0, %v10
    %s152 = ssub.s32 16, 1
    %153 = vst [vmem:[%s149] sm:%s152] %v150
    %s154 = scalar_lea.vmem [#allocation7], 88
    %v155 = vpack.c.bf16 0.0, %v10
    %s157 = ssub.s32 16, 1
    %158 = vst [vmem:[%s154] sm:%s157] %v155
    %s159 = scalar_lea.vmem [#allocation7], 92
    %v160 = vpack.c.bf16 0.0, %v10
    %s162 = ssub.s32 16, 1
    %163 = vst [vmem:[%s159] sm:%s162] %v160
    %s164 = scalar_lea.vmem [#allocation7], 96
    %v165 = vpack.c.bf16 0.0, %v10
    %s167 = ssub.s32 16, 1
    %168 = vst [vmem:[%s164] sm:%s167] %v165
    %s169 = scalar_lea.vmem [#allocation7], 100
    %v170 = vpack.c.bf16 0.0, %v10
    %s172 = ssub.s32 16, 1
    %173 = vst [vmem:[%s169] sm:%s172] %v170
    %s174 = scalar_lea.vmem [#allocation7], 104
    %v175 = vpack.c.bf16 0.0, %v10
    %s177 = ssub.s32 16, 1
    %178 = vst [vmem:[%s174] sm:%s177] %v175
    %s179 = scalar_lea.vmem [#allocation7], 108
    %v180 = vpack.c.bf16 0.0, %v10
    %s182 = ssub.s32 16, 1
    %183 = vst [vmem:[%s179] sm:%s182] %v180
    %s184 = scalar_lea.vmem [#allocation7], 112
    %v185 = vpack.c.bf16 0.0, %v10
    %s187 = ssub.s32 16, 1
    %188 = vst [vmem:[%s184] sm:%s187] %v185
    %s189 = scalar_lea.vmem [#allocation7], 116
    %v190 = vpack.c.bf16 0.0, %v10
    %s192 = ssub.s32 16, 1
    %193 = vst [vmem:[%s189] sm:%s192] %v190
    %s194 = scalar_lea.vmem [#allocation7], 120
    %v195 = vpack.c.bf16 0.0, %v10
    %s197 = ssub.s32 16, 1
    %198 = vst [vmem:[%s194] sm:%s197] %v195
    %s199 = scalar_lea.vmem [#allocation7], 124
    %v200 = vpack.c.bf16 0.0, %v10
    %s202 = ssub.s32 16, 1
    %203 = vst [vmem:[%s199] sm:%s202] %v200
    %v205 = vld [vmem:[#allocation7] sm:$0xff]
    %v206 = vld [vmem:[#allocation7 + $0x8] sm:$0xff]
    %v207 = vld [vmem:[#allocation7 + $0x10] sm:$0xff]
    %v208 = vld [vmem:[#allocation7 + $0x18] sm:$0xff]
    %v209 = vld [vmem:[#allocation7 + $0x20] sm:$0xff]
    %v210 = vld [vmem:[#allocation7 + $0x28] sm:$0xff]
    %v211 = vld [vmem:[#allocation7 + $0x30] sm:$0xff]
    %v212 = vld [vmem:[#allocation7 + $0x38] sm:$0xff]
    %v213 = vld [vmem:[#allocation7 + $0x40] sm:$0xff]
    %v214 = vld [vmem:[#allocation7 + $0x48] sm:$0xff]
    %v215 = vld [vmem:[#allocation7 + $0x50] sm:$0xff]
    %v216 = vld [vmem:[#allocation7 + $0x58] sm:$0xff]
    %v217 = vld [vmem:[#allocation7 + $0x60] sm:$0xff]
    %v218 = vld [vmem:[#allocation7 + $0x68] sm:$0xff]
    %v219 = vld [vmem:[#allocation7 + $0x70] sm:$0xff]
    %v220 = vld [vmem:[#allocation7 + $0x78] sm:$0xff]
    %v221 = vld [vmem:[%s0] sm:$0xf]
    %v222 = vld [vmem:[%s0 + $0x4] sm:$0xf]
    %v223 = vld [vmem:[%s0 + $0x8] sm:$0xf]
    %v224 = vld [vmem:[%s0 + $0xc] sm:$0xf]
    %v225 = vld [vmem:[%s0 + $0x10] sm:$0xf]
    %v226 = vld [vmem:[%s0 + $0x14] sm:$0xf]
    %v227 = vld [vmem:[%s0 + $0x18] sm:$0xf]
    %v228 = vld [vmem:[%s0 + $0x1c] sm:$0xf]
    %v229 = vld [vmem:[%s0 + $0x20] sm:$0xf]
    %v230 = vld [vmem:[%s0 + $0x24] sm:$0xf]
    %v231 = vld [vmem:[%s0 + $0x28] sm:$0xf]
    %v232 = vld [vmem:[%s0 + $0x2c] sm:$0xf]
    %v233 = vld [vmem:[%s0 + $0x30] sm:$0xf]
    %v234 = vld [vmem:[%s0 + $0x34] sm:$0xf]
    %v235 = vld [vmem:[%s0 + $0x38] sm:$0xf]
    %v236 = vld [vmem:[%s0 + $0x3c] sm:$0xf]
    %v237 = vld [vmem:[%s0 + $0x40] sm:$0xf]
    %v238 = vld [vmem:[%s0 + $0x44] sm:$0xf]
    %v239 = vld [vmem:[%s0 + $0x48] sm:$0xf]
    %v240 = vld [vmem:[%s0 + $0x4c] sm:$0xf]
    %v241 = vld [vmem:[%s0 + $0x50] sm:$0xf]
    %v242 = vld [vmem:[%s0 + $0x54] sm:$0xf]
    %v243 = vld [vmem:[%s0 + $0x58] sm:$0xf]
    %v244 = vld [vmem:[%s0 + $0x5c] sm:$0xf]
    %v245 = vld [vmem:[%s0 + $0x60] sm:$0xf]
    %v246 = vld [vmem:[%s0 + $0x64] sm:$0xf]
    %v247 = vld [vmem:[%s0 + $0x68] sm:$0xf]
    %v248 = vld [vmem:[%s0 + $0x6c] sm:$0xf]
    %v249 = vld [vmem:[%s0 + $0x70] sm:$0xf]
    %v250 = vld [vmem:[%s0 + $0x74] sm:$0xf]
    %v251 = vld [vmem:[%s0 + $0x78] sm:$0xf]
    %v252 = vld [vmem:[%s0 + $0x7c] sm:$0xf]
    %v253 = vld [vmem:[%s1] sm:$0x1]
    %v255 = vlaneseq
    %v256 = vshrl.u32 %v255, 7
    %v257 = vsub.s32 0, %v256
    %v258 = vrot.slane %v253, %v257
    %v276 = vunpack.c.l.b16 %v205
    %v277 = vunpack.c.h.b16 %v205
    %v278 = vunpack.c.l.b16 %v206
    %v279 = vunpack.c.h.b16 %v206
    %v280 = vunpack.c.l.b16 %v207
    %v281 = vunpack.c.h.b16 %v207
    %v282 = vunpack.c.l.b16 %v208
    %v283 = vunpack.c.h.b16 %v208
    %v284 = vunpack.c.l.b16 %v209
    %v285 = vunpack.c.h.b16 %v209
    %v286 = vunpack.c.l.b16 %v210
    %v287 = vunpack.c.h.b16 %v210
    %v288 = vunpack.c.l.b16 %v211
    %v289 = vunpack.c.h.b16 %v211
    %v290 = vunpack.c.l.b16 %v212
    %v291 = vunpack.c.h.b16 %v212
    %v292 = vunpack.c.l.b16 %v213
    %v293 = vunpack.c.h.b16 %v213
    %v294 = vunpack.c.l.b16 %v214
    %v295 = vunpack.c.h.b16 %v214
    %v296 = vunpack.c.l.b16 %v215
    %v297 = vunpack.c.h.b16 %v215
    %v298 = vunpack.c.l.b16 %v216
    %v299 = vunpack.c.h.b16 %v216
    %v300 = vunpack.c.l.b16 %v217
    %v301 = vunpack.c.h.b16 %v217
    %v302 = vunpack.c.l.b16 %v218
    %v303 = vunpack.c.h.b16 %v218
    %v304 = vunpack.c.l.b16 %v219
    %v305 = vunpack.c.h.b16 %v219
    %v306 = vunpack.c.l.b16 %v220
    %v307 = vunpack.c.h.b16 %v220
    %v308 = vpack.c.b16 %v278, %v276
    %v309 = vpack.c.b16 %v279, %v277
    %v310 = vpack.c.b16 %v282, %v280
    %v311 = vpack.c.b16 %v283, %v281
    %v312 = vpack.c.b16 %v286, %v284
    %v313 = vpack.c.b16 %v287, %v285
    %v314 = vpack.c.b16 %v290, %v288
    %v315 = vpack.c.b16 %v291, %v289
    %v316 = vpack.c.b16 %v294, %v292
    %v317 = vpack.c.b16 %v295, %v293
    %v318 = vpack.c.b16 %v298, %v296
    %v319 = vpack.c.b16 %v299, %v297
    %v320 = vpack.c.b16 %v302, %v300
    %v321 = vpack.c.b16 %v303, %v301
    %v322 = vpack.c.b16 %v306, %v304
    %v323 = vpack.c.b16 %v307, %v305
    %v372 = vunpack.c.l.b16 %v221
    %v373 = vunpack.c.l.b16 %v222
    %v374 = vunpack.c.l.b16 %v223
    %v375 = vunpack.c.l.b16 %v224
    %v376 = vunpack.c.l.b16 %v225
    %v377 = vunpack.c.l.b16 %v226
    %v378 = vunpack.c.l.b16 %v227
    %v379 = vunpack.c.l.b16 %v228
    %v380 = vunpack.c.l.b16 %v229
    %v381 = vunpack.c.l.b16 %v230
    %v382 = vunpack.c.l.b16 %v231
    %v383 = vunpack.c.l.b16 %v232
    %v384 = vunpack.c.l.b16 %v233
    %v385 = vunpack.c.l.b16 %v234
    %v386 = vunpack.c.l.b16 %v235
    %v387 = vunpack.c.l.b16 %v236
    %v388 = vunpack.c.l.b16 %v237
    %v389 = vunpack.c.l.b16 %v238
    %v390 = vunpack.c.l.b16 %v239
    %v391 = vunpack.c.l.b16 %v240
    %v392 = vunpack.c.l.b16 %v241
    %v393 = vunpack.c.l.b16 %v242
    %v394 = vunpack.c.l.b16 %v243
    %v395 = vunpack.c.l.b16 %v244
    %v396 = vunpack.c.l.b16 %v245
    %v397 = vunpack.c.l.b16 %v246
    %v398 = vunpack.c.l.b16 %v247
    %v399 = vunpack.c.l.b16 %v248
    %v400 = vunpack.c.l.b16 %v249
    %v401 = vunpack.c.l.b16 %v250
    %v402 = vunpack.c.l.b16 %v251
    %v403 = vunpack.c.l.b16 %v252
    %v404 = vpack.c.b16 %v373, %v372
    %v405 = vpack.c.b16 %v375, %v374
    %v406 = vpack.c.b16 %v377, %v376
    %v407 = vpack.c.b16 %v379, %v378
    %v408 = vpack.c.b16 %v381, %v380
    %v409 = vpack.c.b16 %v383, %v382
    %v410 = vpack.c.b16 %v385, %v384
    %v411 = vpack.c.b16 %v387, %v386
    %v412 = vpack.c.b16 %v389, %v388
    %v413 = vpack.c.b16 %v391, %v390
    %v414 = vpack.c.b16 %v393, %v392
    %v415 = vpack.c.b16 %v395, %v394
    %v416 = vpack.c.b16 %v397, %v396
    %v417 = vpack.c.b16 %v399, %v398
    %v418 = vpack.c.b16 %v401, %v400
    %v419 = vpack.c.b16 %v403, %v402
    %436 = vmatprep.subr.bf16.mxu0 0
    %437 = vmatpush1.bf16.msra.mxu0 %v411
    %438 = vmatprep.subr.bf16.mxu0 0
    %439 = vmatpush1.bf16.msra.mxu0 %v410
    %440 = vmatprep.subr.bf16.mxu0 0
    %441 = vmatpush1.bf16.msra.mxu0 %v409
    %442 = vmatprep.subr.bf16.mxu0 0
    %443 = vmatpush1.bf16.msra.mxu0 %v408
    %444 = vmatprep.subr.bf16.mxu0 0
    %445 = vmatpush1.bf16.msra.mxu0 %v407
    %446 = vmatprep.subr.bf16.mxu0 0
    %447 = vmatpush1.bf16.msra.mxu0 %v406
    %448 = vmatprep.subr.bf16.mxu0 0
    %449 = vmatpush1.bf16.msra.mxu0 %v405
    %450 = vmatprep.subr.bf16.mxu0 0
    %451 = vmatpush1.bf16.msra.mxu0 %v404
    %452 = vmatprep.subr.bf16.mxu0 0
    %453 = vmatpush2.bf16.msra.mxu0 %v419
    %454 = vmatprep.subr.bf16.mxu0 0
    %455 = vmatpush2.bf16.msra.mxu0 %v418
    %456 = vmatprep.subr.bf16.mxu0 0
    %457 = vmatpush2.bf16.msra.mxu0 %v417
    %458 = vmatprep.subr.bf16.mxu0 0
    %459 = vmatpush2.bf16.msra.mxu0 %v416
    %460 = vmatprep.subr.bf16.mxu0 0
    %461 = vmatpush2.bf16.msra.mxu0 %v415
    %462 = vmatprep.subr.bf16.mxu0 0
    %463 = vmatpush2.bf16.msra.mxu0 %v414
    %464 = vmatprep.subr.bf16.mxu0 0
    %465 = vmatpush2.bf16.msra.mxu0 %v413
    %466 = vmatprep.subr.bf16.mxu0 0
    %467 = vmatpush2.bf16.msra.mxu0 %v412
    %468 = vmatprep.mubr.bf16.mxu0 %v309
    %469 = vmatmul.mubr.bf16.gmra.mxu0 %v308
    %v470 = vpop.f32.mrf.mxu0
    %v471 = vadd.f32 %v258, %v470
    %v472 = vpop.f32.mrf.mxu0
    %v473 = vpop.f32.mrf.mxu0
    %v474 = vadd.f32 %v258, %v473
    %v475 = vpop.f32.mrf.mxu0
    %476 = vmatprep.mubr.bf16.mxu0 %v311
    %477 = vmatmul.mubr.bf16.gmra.mxu0 %v310
    %v478 = vpop.f32.mrf.mxu0
    %v479 = vadd.f32 %v258, %v478
    %v480 = vpop.f32.mrf.mxu0
    %v481 = vpop.f32.mrf.mxu0
    %v482 = vadd.f32 %v258, %v481
    %v483 = vpop.f32.mrf.mxu0
    %484 = vmatprep.mubr.bf16.mxu0 %v313
    %485 = vmatmul.mubr.bf16.gmra.mxu0 %v312
    %v486 = vpop.f32.mrf.mxu0
    %v487 = vadd.f32 %v258, %v486
    %v488 = vpop.f32.mrf.mxu0
    %v489 = vpop.f32.mrf.mxu0
    %v490 = vadd.f32 %v258, %v489
    %v491 = vpop.f32.mrf.mxu0
    %492 = vmatprep.mubr.bf16.mxu0 %v315
    %493 = vmatmul.mubr.bf16.gmra.mxu0 %v314
    %v494 = vpop.f32.mrf.mxu0
    %v495 = vadd.f32 %v258, %v494
    %v496 = vpop.f32.mrf.mxu0
    %v497 = vpop.f32.mrf.mxu0
    %v498 = vadd.f32 %v258, %v497
    %v499 = vpop.f32.mrf.mxu0
    %500 = vmatprep.mubr.bf16.mxu0 %v317
    %501 = vmatmul.mubr.bf16.gmra.mxu0 %v316
    %v502 = vpop.f32.mrf.mxu0
    %v503 = vadd.f32 %v258, %v502
    %v504 = vpop.f32.mrf.mxu0
    %v505 = vpop.f32.mrf.mxu0
    %v506 = vadd.f32 %v258, %v505
    %v507 = vpop.f32.mrf.mxu0
    %508 = vmatprep.mubr.bf16.mxu0 %v319
    %509 = vmatmul.mubr.bf16.gmra.mxu0 %v318
    %v510 = vpop.f32.mrf.mxu0
    %v511 = vadd.f32 %v258, %v510
    %v512 = vpop.f32.mrf.mxu0
    %v513 = vpop.f32.mrf.mxu0
    %v514 = vadd.f32 %v258, %v513
    %v515 = vpop.f32.mrf.mxu0
    %516 = vmatprep.mubr.bf16.mxu0 %v321
    %517 = vmatmul.mubr.bf16.gmra.mxu0 %v320
    %v518 = vpop.f32.mrf.mxu0
    %v519 = vadd.f32 %v258, %v518
    %v520 = vpop.f32.mrf.mxu0
    %v521 = vpop.f32.mrf.mxu0
    %v522 = vadd.f32 %v258, %v521
    %v523 = vpop.f32.mrf.mxu0
    %524 = vmatprep.mubr.bf16.mxu0 %v323
    %525 = vmatmul.mubr.bf16.gmra.mxu0 %v322
    %v526 = vpop.f32.mrf.mxu0
    %v527 = vadd.f32 %v258, %v526
    %v528 = vpop.f32.mrf.mxu0
    %v529 = vpop.f32.mrf.mxu0
    %v530 = vadd.f32 %v258, %v529
    %v531 = vpop.f32.mrf.mxu0
    %532 = vdwg.mxu0
    %533 = vst [vmem:[%s4] sm:$0xff] %v471
    %534 = vst [vmem:[%s4 + $0x8] sm:$0xff] %v474
    %535 = vst [vmem:[%s4 + $0x10] sm:$0xff] %v479
    %536 = vst [vmem:[%s4 + $0x18] sm:$0xff] %v482
    %537 = vst [vmem:[%s4 + $0x20] sm:$0xff] %v487
    %538 = vst [vmem:[%s4 + $0x28] sm:$0xff] %v490
    %539 = vst [vmem:[%s4 + $0x30] sm:$0xff] %v495
    %540 = vst [vmem:[%s4 + $0x38] sm:$0xff] %v498
    %541 = vst [vmem:[%s4 + $0x40] sm:$0xff] %v503
    %542 = vst [vmem:[%s4 + $0x48] sm:$0xff] %v506
    %543 = vst [vmem:[%s4 + $0x50] sm:$0xff] %v511
    %544 = vst [vmem:[%s4 + $0x58] sm:$0xff] %v514
    %545 = vst [vmem:[%s4 + $0x60] sm:$0xff] %v519
    %546 = vst [vmem:[%s4 + $0x68] sm:$0xff] %v522
    %547 = vst [vmem:[%s4 + $0x70] sm:$0xff] %v527
    %548 = vst [vmem:[%s4 + $0x78] sm:$0xff] %v530
    // Predicated region
    $region14: #{patch_embed_pallas.2} parent=1 // pred_check
      _
    $region15: #{patch_embed_pallas.2} parent=1 // pred_check_branch
      %550 = sbr.rel (0) target = $region17
    $region16: #{patch_embed_pallas.2} parent=1 // pred_region
      _
    $region17: #{patch_embed_pallas.2} parent=1 // pred_fallthru
      _
    // Predicated region
    $region18: #{patch_embed_pallas.2} parent=1 // pred_check
      _
    $region19: #{patch_embed_pallas.2} parent=1 // pred_check_branch
      %552 = sbr.rel (0) target = $region21
    $region20: #{patch_embed_pallas.2} parent=1 // pred_region
      _
    $region21: #{patch_embed_pallas.2} parent=1 // pred_fallthru
      _

</llo_original>
